<compile_context>
chip_gen: v5e
topology: v5e:2x2
jax: 0.10.0
libtpu: 0.0.40
codegen_flags: <defaults>
</compile_context>

<pallas_src>
import jax
import jax.numpy as jnp
from jax.experimental import pallas as pl
from jax.experimental.pallas import tpu as pltpu

B, S, C, L = 2, 8, 4, 16   # batches, sub_batch_size, waveform channels, waveform length
K = 3                      # conv kernel size (padding=1)
F = 32                     # breath_block.n_out_filters
H = 32                     # time_layer_hidden_units (LSTM hidden size)
NCLS = 2                   # linear_final output size
N = B * S                  # total breaths


# ---------------- fused Pallas kernel ----------------

def siamese_fused_kernel(patch_ref, w2_ref, b2_ref, wx_ref, wh_ref, bg_ref, h_out_ref):
    """Conv1d(im2col matmul) + ReLU + global avg pool + unrolled LSTM, all in VMEM/vregs.

    patch: (N*L, C*K) im2col patches, w2: (C*K, F), b2: (1, F),
    wx: (F, 4H), wh: (H, 4H), bg: (1, 4H)  -- gate columns permuted to [i|f|o|g],
    out: (B, S, H) LSTM hidden states (linear_final applied in the wrapper).
    """
    # breath_block: conv as one MXU matmul + bias + ReLU
    act = jnp.dot(patch_ref[...], w2_ref[...], preferred_element_type=jnp.float32)
    act = jnp.maximum(act + b2_ref[...], 0.0)                       # (N*L, F)

    # global average pool over L: cheap sublane reduction, no pooling matmul / extra DMA
    feats = act.reshape(N, L, F).sum(axis=1) * (1.0 / L)            # (N, F)

    # LSTM over time (seq = B batches), state carried in vregs, fully unrolled (B == 2).
    h_t = jnp.zeros((S, H), jnp.float32)
    c_t = jnp.zeros((S, H), jnp.float32)
    for t in range(B):
        x_t = feats[t * S:(t + 1) * S, :]                           # (S, F), sublane-aligned
        gates = (jnp.dot(x_t, wx_ref[...], preferred_element_type=jnp.float32)
                 + jnp.dot(h_t, wh_ref[...], preferred_element_type=jnp.float32)
                 + bg_ref[...])                                     # (S, 4H) = one f32 vreg
        sig = jax.nn.sigmoid(gates[:, :3 * H])                      # i, f, o in one EUP slab
        g_g = jnp.tanh(gates[:, 3 * H:])                            # g
        c_t = sig[:, H:2 * H] * c_t + sig[:, :H] * g_g
        h_t = sig[:, 2 * H:3 * H] * jnp.tanh(c_t)
        h_out_ref[t] = h_t                                          # (S, H) row-block


# ---------------- wrapper (glue in plain JAX) ----------------

def siamese_forward(x, _unused, params):
    """Equivalent of SiameseARDSClassifier.forward(x, _)."""
    conv_w, conv_b = params["conv_w"], params["conv_b"]      # (F, C, K), (F,)
    w_ih, w_hh = params["w_ih"], params["w_hh"]              # (4H, F), (4H, H)
    b_ih, b_hh = params["b_ih"], params["b_hh"]              # (4H,), (4H,)
    fin_w, fin_b = params["fin_w"], params["fin_b"]          # (2, H), (2,)

    # glue: im2col for Conv1d(padding=1); the per-batch torch loop + cat is just a reshape.
    xf = x.reshape(N, C, L).astype(jnp.float32)
    xp = jnp.pad(xf, ((0, 0), (0, 0), (1, 1)))
    idx = jnp.arange(L)[:, None] + jnp.arange(K)[None, :]    # (L, K)
    patches = xp[:, :, idx].transpose(0, 2, 1, 3).reshape(N * L, C * K)
    w2 = conv_w.reshape(F, C * K).T                          # (C*K, F), index = c*K + k
    b2 = conv_b[None, :]

    # permute PyTorch gate blocks [i, f, g, o] -> [i, f, o, g] so the kernel applies one
    # sigmoid to a contiguous (S, 3H) slab and one tanh to (S, H).
    def _perm(a):
        i, f, g, o = jnp.split(a, 4, axis=0)
        return jnp.concatenate([i, f, o, g], axis=0)

    wx = _perm(w_ih).T                      # (F, 4H)
    wh = _perm(w_hh).T                      # (H, 4H)
    bg = _perm(b_ih + b_hh)[None, :]        # (1, 4H)

    hs = pl.pallas_call(
        siamese_fused_kernel,
        out_shape=jax.ShapeDtypeStruct((B, S, H), jnp.float32),
        grid=(1,),
        in_specs=[pl.BlockSpec((N * L, C * K), lambda i: (0, 0)),
                  pl.BlockSpec((C * K, F), lambda i: (0, 0)),
                  pl.BlockSpec((1, F), lambda i: (0, 0)),
                  pl.BlockSpec((F, 4 * H), lambda i: (0, 0)),
                  pl.BlockSpec((H, 4 * H), lambda i: (0, 0)),
                  pl.BlockSpec((1, 4 * H), lambda i: (0, 0))],
        out_specs=pl.BlockSpec((B, S, H), lambda i: (0, 0, 0)),
        compiler_params=pltpu.CompilerParams(dimension_semantics=("arbitrary",)),
        cost_estimate=pl.CostEstimate(flops=480_000, transcendentals=2_560,
                                      bytes_accessed=50_000),
    )(patches, w2, b2, wx, wh, bg)

    # linear_final (H -> 2): tiny projection kept in XLA so the kernel's stored output
    # stays at lane width 32 instead of a 2-wide masked store.
    return hs @ fin_w.T + fin_b


# ---------------- pure-JAX reference for verification ----------------

def reference_forward(x, params):
    xf = x.reshape(N, C, L).astype(jnp.float32)
    xp = jnp.pad(xf, ((0, 0), (0, 0), (1, 1)))
    y = jnp.zeros((N, F, L), jnp.float32)
    for k in range(K):
        y = y + jnp.einsum("ncl,fc->nfl", xp[:, :, k:k + L], params["conv_w"][:, :, k])
    y = jax.nn.relu(y + params["conv_b"][None, :, None])
    feats = y.mean(axis=-1).reshape(B, S, F)

    def step(carry, x_t):
        h, c = carry
        gates = (x_t @ params["w_ih"].T + params["b_ih"]
                 + h @ params["w_hh"].T + params["b_hh"])
        i, f, g, o = jnp.split(gates, 4, axis=-1)
        i, f, o = jax.nn.sigmoid(i), jax.nn.sigmoid(f), jax.nn.sigmoid(o)
        g = jnp.tanh(g)
        c = f * c + i * g
        h = o * jnp.tanh(c)
        return (h, c), h

    h0 = jnp.zeros((S, H), jnp.float32)
    _, hs = jax.lax.scan(step, (h0, h0), feats)
    return hs @ params["fin_w"].T + params["fin_b"]


# ---------------- main ----------------

if __name__ == "__main__":
    key = jax.random.PRNGKey(0)
    ks = jax.random.split(key, 8)
    params = {
        "conv_w": 0.1 * jax.random.normal(ks[0], (F, C, K), jnp.float32),
        "conv_b": 0.1 * jax.random.normal(ks[1], (F,), jnp.float32),
        "w_ih":   0.1 * jax.random.normal(ks[2], (4 * H, F), jnp.float32),
        "w_hh":   0.1 * jax.random.normal(ks[3], (4 * H, H), jnp.float32),
        "b_ih":   0.1 * jax.random.normal(ks[4], (4 * H,), jnp.float32),
        "b_hh":   0.1 * jax.random.normal(ks[5], (4 * H,), jnp.float32),
        "fin_w":  0.1 * jax.random.normal(ks[6], (NCLS, H), jnp.float32),
        "fin_b":  0.1 * jax.random.normal(ks[7], (NCLS,), jnp.float32),
    }

    x = jax.random.normal(jax.random.PRNGKey(1), (B, S, C, L), jnp.float32)
    dummy = jnp.zeros((B,), jnp.float32)   # second forward arg is ignored, as in torch

    out = jax.block_until_ready(siamese_forward(x, dummy, params))
    ref = jax.block_until_ready(reference_forward(x, params))

    assert out.shape == (B, S, NCLS)
    assert jnp.allclose(out, ref, atol=1e-4, rtol=1e-4), (out, ref)
    print("KERNEL_OK")
</pallas_src>

<mosaic_0001>
module attributes {stable_mosaic.version = 11 : i64} {
  func.func @siamese_fused_kernel(%arg0: i32, %arg1: memref<256x12xf32, #tpu.memory_space<vmem>>, %arg2: memref<12x32xf32, #tpu.memory_space<vmem>>, %arg3: memref<1x32xf32, #tpu.memory_space<vmem>>, %arg4: memref<32x128xf32, #tpu.memory_space<vmem>>, %arg5: memref<32x128xf32, #tpu.memory_space<vmem>>, %arg6: memref<1x128xf32, #tpu.memory_space<vmem>>, %arg7: memref<2x8x32xf32, #tpu.memory_space<vmem>>) attributes {dimension_semantics = [#tpu.dimension_semantics<arbitrary>], iteration_bounds = array<i64: 1>, scalar_prefetch = 0 : i64, scratch_operands = 0 : i64, tpu.core_type = #tpu.core_type<tc>, window_params = [{pipeline_mode = #tpu.pipeline_mode<synchronous>, transform_indices = @transform_0, window_bounds = array<i64: 256, 12>}, {pipeline_mode = #tpu.pipeline_mode<synchronous>, transform_indices = @transform_1, window_bounds = array<i64: 12, 32>}, {pipeline_mode = #tpu.pipeline_mode<synchronous>, transform_indices = @transform_2, window_bounds = array<i64: 1, 32>}, {pipeline_mode = #tpu.pipeline_mode<synchronous>, transform_indices = @transform_3, window_bounds = array<i64: 32, 128>}, {pipeline_mode = #tpu.pipeline_mode<synchronous>, transform_indices = @transform_4, window_bounds = array<i64: 32, 128>}, {pipeline_mode = #tpu.pipeline_mode<synchronous>, transform_indices = @transform_5, window_bounds = array<i64: 1, 128>}, {pipeline_mode = #tpu.pipeline_mode<synchronous>, transform_indices = @transform_6, window_bounds = array<i64: 2, 8, 32>}]} {
    %c0 = arith.constant 0 : index
    %c0_0 = arith.constant 0 : index
    %0 = vector.load %arg1[%c0, %c0_0] : memref<256x12xf32, #tpu.memory_space<vmem>>, vector<256x12xf32>
    %c0_1 = arith.constant 0 : index
    %c0_2 = arith.constant 0 : index
    %1 = vector.load %arg2[%c0_1, %c0_2] : memref<12x32xf32, #tpu.memory_space<vmem>>, vector<12x32xf32>
    %cst = arith.constant dense<0.000000e+00> : vector<256x32xf32>
    %2 = tpu.matmul %0, %1, %cst {dimension_numbers = #tpu.dot_dimension_numbers<[1], [0], [0], [1], [0, 0, 1, 1], [], []>} : vector<256x12xf32>, vector<12x32xf32>, vector<256x32xf32> -> vector<256x32xf32>
    %c0_3 = arith.constant 0 : index
    %c0_4 = arith.constant 0 : index
    %3 = vector.load %arg3[%c0_3, %c0_4] : memref<1x32xf32, #tpu.memory_space<vmem>>, vector<1x32xf32>
    %4 = vector.broadcast %3 : vector<1x32xf32> to vector<256x32xf32>
    %5 = arith.addf %2, %4 : vector<256x32xf32>
    %cst_5 = arith.constant 0.000000e+00 : f32
    %6 = vector.broadcast %cst_5 : f32 to vector<256x32xf32>
    %7 = arith.maximumf %5, %6 : vector<256x32xf32>
    %8 = vector.shape_cast %7 : vector<256x32xf32> to vector<16x16x32xf32>
    %cst_6 = arith.constant dense<0.000000e+00> : vector<16x32xf32>
    %9 = vector.multi_reduction <add>, %8, %cst_6 [1] : vector<16x16x32xf32> to vector<16x32xf32>
    %cst_7 = arith.constant 6.250000e-02 : f32
    %10 = vector.broadcast %cst_7 : f32 to vector<16x32xf32>
    %11 = arith.mulf %9, %10 : vector<16x32xf32>
    %cst_8 = arith.constant 0.000000e+00 : f32
    %12 = vector.broadcast %cst_8 : f32 to vector<8x32xf32>
    %cst_9 = arith.constant 0.000000e+00 : f32
    %13 = vector.broadcast %cst_9 : f32 to vector<8x32xf32>
    %14 = vector.extract_strided_slice %11 {offsets = [0, 0], sizes = [8, 32], strides = [1, 1]} : vector<16x32xf32> to vector<8x32xf32>
    %c0_10 = arith.constant 0 : index
    %c0_11 = arith.constant 0 : index
    %15 = vector.load %arg4[%c0_10, %c0_11] : memref<32x128xf32, #tpu.memory_space<vmem>>, vector<32x128xf32>
    %cst_12 = arith.constant dense<0.000000e+00> : vector<8x128xf32>
    %16 = tpu.matmul %14, %15, %cst_12 {dimension_numbers = #tpu.dot_dimension_numbers<[1], [0], [0], [1], [0, 0, 1, 1], [], []>} : vector<8x32xf32>, vector<32x128xf32>, vector<8x128xf32> -> vector<8x128xf32>
    %c0_13 = arith.constant 0 : index
    %c0_14 = arith.constant 0 : index
    %17 = vector.load %arg5[%c0_13, %c0_14] : memref<32x128xf32, #tpu.memory_space<vmem>>, vector<32x128xf32>
    %cst_15 = arith.constant dense<0.000000e+00> : vector<8x128xf32>
    %18 = tpu.matmul %12, %17, %cst_15 {dimension_numbers = #tpu.dot_dimension_numbers<[1], [0], [0], [1], [0, 0, 1, 1], [], []>} : vector<8x32xf32>, vector<32x128xf32>, vector<8x128xf32> -> vector<8x128xf32>
    %19 = arith.addf %16, %18 : vector<8x128xf32>
    %c0_16 = arith.constant 0 : index
    %c0_17 = arith.constant 0 : index
    %20 = vector.load %arg6[%c0_16, %c0_17] : memref<1x128xf32, #tpu.memory_space<vmem>>, vector<1x128xf32>
    %21 = vector.broadcast %20 : vector<1x128xf32> to vector<8x128xf32>
    %22 = arith.addf %19, %21 : vector<8x128xf32>
    %23 = vector.extract_strided_slice %22 {offsets = [0, 0], sizes = [8, 96], strides = [1, 1]} : vector<8x128xf32> to vector<8x96xf32>
    %24 = arith.negf %23 : vector<8x96xf32>
    %25 = math.exp %24 : vector<8x96xf32>
    %cst_18 = arith.constant 1.000000e+00 : f32
    %26 = vector.broadcast %cst_18 : f32 to vector<8x96xf32>
    %27 = arith.addf %26, %25 : vector<8x96xf32>
    %28 = arith.divf %26, %27 : vector<8x96xf32>
    %29 = vector.extract_strided_slice %22 {offsets = [0, 96], sizes = [8, 32], strides = [1, 1]} : vector<8x128xf32> to vector<8x32xf32>
    %30 = math.tanh %29 : vector<8x32xf32>
    %31 = vector.extract_strided_slice %28 {offsets = [0, 32], sizes = [8, 32], strides = [1, 1]} : vector<8x96xf32> to vector<8x32xf32>
    %32 = arith.mulf %31, %13 : vector<8x32xf32>
    %33 = vector.extract_strided_slice %28 {offsets = [0, 0], sizes = [8, 32], strides = [1, 1]} : vector<8x96xf32> to vector<8x32xf32>
    %34 = arith.mulf %33, %30 : vector<8x32xf32>
    %35 = arith.addf %32, %34 : vector<8x32xf32>
    %36 = vector.extract_strided_slice %28 {offsets = [0, 64], sizes = [8, 32], strides = [1, 1]} : vector<8x96xf32> to vector<8x32xf32>
    %37 = math.tanh %35 : vector<8x32xf32>
    %38 = arith.mulf %36, %37 : vector<8x32xf32>
    %c0_19 = arith.constant 0 : index
    %c0_20 = arith.constant 0 : index
    %c0_21 = arith.constant 0 : index
    %39 = vector.load %arg7[%c0_19, %c0_20, %c0_21] : memref<2x8x32xf32, #tpu.memory_space<vmem>>, vector<1x8x32xf32>
    %40 = vector.shape_cast %39 : vector<1x8x32xf32> to vector<8x32xf32>
    %41 = vector.shape_cast %38 : vector<8x32xf32> to vector<1x8x32xf32>
    tpu.vector_store %arg7[%c0_19, %c0_20, %c0_21], %41 {strides = array<i32>} : memref<2x8x32xf32, #tpu.memory_space<vmem>>, vector<1x8x32xf32>,
    %42 = vector.extract_strided_slice %11 {offsets = [8, 0], sizes = [8, 32], strides = [1, 1]} : vector<16x32xf32> to vector<8x32xf32>
    %c0_22 = arith.constant 0 : index
    %c0_23 = arith.constant 0 : index
    %43 = vector.load %arg4[%c0_22, %c0_23] : memref<32x128xf32, #tpu.memory_space<vmem>>, vector<32x128xf32>
    %cst_24 = arith.constant dense<0.000000e+00> : vector<8x128xf32>
    %44 = tpu.matmul %42, %43, %cst_24 {dimension_numbers = #tpu.dot_dimension_numbers<[1], [0], [0], [1], [0, 0, 1, 1], [], []>} : vector<8x32xf32>, vector<32x128xf32>, vector<8x128xf32> -> vector<8x128xf32>
    %c0_25 = arith.constant 0 : index
    %c0_26 = arith.constant 0 : index
    %45 = vector.load %arg5[%c0_25, %c0_26] : memref<32x128xf32, #tpu.memory_space<vmem>>, vector<32x128xf32>
    %cst_27 = arith.constant dense<0.000000e+00> : vector<8x128xf32>
    %46 = tpu.matmul %38, %45, %cst_27 {dimension_numbers = #tpu.dot_dimension_numbers<[1], [0], [0], [1], [0, 0, 1, 1], [], []>} : vector<8x32xf32>, vector<32x128xf32>, vector<8x128xf32> -> vector<8x128xf32>
    %47 = arith.addf %44, %46 : vector<8x128xf32>
    %c0_28 = arith.constant 0 : index
    %c0_29 = arith.constant 0 : index
    %48 = vector.load %arg6[%c0_28, %c0_29] : memref<1x128xf32, #tpu.memory_space<vmem>>, vector<1x128xf32>
    %49 = vector.broadcast %48 : vector<1x128xf32> to vector<8x128xf32>
    %50 = arith.addf %47, %49 : vector<8x128xf32>
    %51 = vector.extract_strided_slice %50 {offsets = [0, 0], sizes = [8, 96], strides = [1, 1]} : vector<8x128xf32> to vector<8x96xf32>
    %52 = arith.negf %51 : vector<8x96xf32>
    %53 = math.exp %52 : vector<8x96xf32>
    %cst_30 = arith.constant 1.000000e+00 : f32
    %54 = vector.broadcast %cst_30 : f32 to vector<8x96xf32>
    %55 = arith.addf %54, %53 : vector<8x96xf32>
    %56 = arith.divf %54, %55 : vector<8x96xf32>
    %57 = vector.extract_strided_slice %50 {offsets = [0, 96], sizes = [8, 32], strides = [1, 1]} : vector<8x128xf32> to vector<8x32xf32>
    %58 = math.tanh %57 : vector<8x32xf32>
    %59 = vector.extract_strided_slice %56 {offsets = [0, 32], sizes = [8, 32], strides = [1, 1]} : vector<8x96xf32> to vector<8x32xf32>
    %60 = arith.mulf %59, %35 : vector<8x32xf32>
    %61 = vector.extract_strided_slice %56 {offsets = [0, 0], sizes = [8, 32], strides = [1, 1]} : vector<8x96xf32> to vector<8x32xf32>
    %62 = arith.mulf %61, %58 : vector<8x32xf32>
    %63 = arith.addf %60, %62 : vector<8x32xf32>
    %64 = vector.extract_strided_slice %56 {offsets = [0, 64], sizes = [8, 32], strides = [1, 1]} : vector<8x96xf32> to vector<8x32xf32>
    %65 = math.tanh %63 : vector<8x32xf32>
    %66 = arith.mulf %64, %65 : vector<8x32xf32>
    %c1 = arith.constant 1 : index
    %c0_31 = arith.constant 0 : index
    %c0_32 = arith.constant 0 : index
    %67 = vector.load %arg7[%c1, %c0_31, %c0_32] : memref<2x8x32xf32, #tpu.memory_space<vmem>>, vector<1x8x32xf32>
    %68 = vector.shape_cast %67 : vector<1x8x32xf32> to vector<8x32xf32>
    %69 = vector.shape_cast %66 : vector<8x32xf32> to vector<1x8x32xf32>
    tpu.vector_store %arg7[%c1, %c0_31, %c0_32], %69 {strides = array<i32>} : memref<2x8x32xf32, #tpu.memory_space<vmem>>, vector<1x8x32xf32>,
    return
  }
  func.func @transform_0(%arg0: i32) -> (i32, i32) {
    %c0_i32 = arith.constant 0 : i32
    %c0_i32_0 = arith.constant 0 : i32
    %c0_i32_1 = arith.constant 0 : i32
    return %c0_i32, %c0_i32_0 : i32, i32
  }
  func.func @transform_1(%arg0: i32) -> (i32, i32) {
    %c0_i32 = arith.constant 0 : i32
    %c0_i32_0 = arith.constant 0 : i32
    %c0_i32_1 = arith.constant 0 : i32
    return %c0_i32, %c0_i32_0 : i32, i32
  }
  func.func @transform_2(%arg0: i32) -> (i32, i32) {
    %c0_i32 = arith.constant 0 : i32
    %c0_i32_0 = arith.constant 0 : i32
    %c0_i32_1 = arith.constant 0 : i32
    return %c0_i32, %c0_i32_0 : i32, i32
  }
  func.func @transform_3(%arg0: i32) -> (i32, i32) {
    %c0_i32 = arith.constant 0 : i32
    %c0_i32_0 = arith.constant 0 : i32
    %c0_i32_1 = arith.constant 0 : i32
    return %c0_i32, %c0_i32_0 : i32, i32
  }
  func.func @transform_4(%arg0: i32) -> (i32, i32) {
    %c0_i32 = arith.constant 0 : i32
    %c0_i32_0 = arith.constant 0 : i32
    %c0_i32_1 = arith.constant 0 : i32
    return %c0_i32, %c0_i32_0 : i32, i32
  }
  func.func @transform_5(%arg0: i32) -> (i32, i32) {
    %c0_i32 = arith.constant 0 : i32
    %c0_i32_0 = arith.constant 0 : i32
    %c0_i32_1 = arith.constant 0 : i32
    return %c0_i32, %c0_i32_0 : i32, i32
  }
  func.func @transform_6(%arg0: i32) -> (i32, i32, i32) {
    %c0_i32 = arith.constant 0 : i32
    %c0_i32_0 = arith.constant 0 : i32
    %c0_i32_1 = arith.constant 0 : i32
    %c0_i32_2 = arith.constant 0 : i32
    return %c0_i32, %c0_i32_0, %c0_i32_1 : i32, i32, i32
  }
}

</mosaic_0001>

<llo_original>
// kernel: tpu_custom_call.1
$region0: #{tpu_custom_call.1}
  #allocation0 [shape = 'u32[]', space=smem, size = 0x4, offset = 0x4, fixed_abs, tag = 'smem constant byte address 0x4 - core index']
  #allocation1 [shape = 'u32[72,128]{1,0:T(1,128)}', space=vmem, size = 0x9000, scoped, tag = 'internal scratch']
  %s0 = inlined_call_operand.vmem [shape: f32[256,12], index: 0, kind: input, shape index: {}]
  %s1 = inlined_call_operand.vmem [shape: f32[12,32], index: 1, kind: input, shape index: {}]
  %s2 = inlined_call_operand.vmem [shape: f32[1,32], index: 2, kind: input, shape index: {}]
  %s3 = inlined_call_operand.vmem [shape: f32[32,128], index: 3, kind: input, shape index: {}]
  %s4 = inlined_call_operand.vmem [shape: f32[32,128], index: 4, kind: input, shape index: {}]
  %s5 = inlined_call_operand.vmem [shape: f32[1,128], index: 5, kind: input, shape index: {}]
  %s6 = inlined_call_operand.hbm [shape: f32[2,8,32], index: 6, kind: output, shape index: {}]
  %s7 = sld [smem:[#allocation0]]
  $region34: #{tpu_custom_call.1} parent=0
    _
  %s9 = ssub.s32 1, %s7
  %s10 = scalar_select 0, %s9, %s7
  $region1: #{tpu_custom_call.1} parent=0
    #allocation2 [shape = 'u8[8192]{0}', space=vmem, size = 0x2000, scoped, tag = 'output window, operand 0, single buffered']
    #allocation3 [shape = 's32[1]{0}', space=sflag, size = 0x4, scoped, tag = 'scoped memory for tpu_custom_call.1']
    %11 = vsyncpa [#allocation3], 0
    // Predicated region
    $region2: #{tpu_custom_call.1} parent=1 // pred_check
      _
    $region3: #{tpu_custom_call.1} parent=1 // pred_check_branch
      %13 = sbr.rel (0) target = $region5
    $region4: #{tpu_custom_call.1} parent=1 // pred_region
      _
    $region5: #{tpu_custom_call.1} parent=1 // pred_fallthru
      _
    // Predicated region
    $region6: #{tpu_custom_call.1} parent=1 // pred_check
      _
    $region7: #{tpu_custom_call.1} parent=1 // pred_check_branch
      %15 = sbr.rel (0) target = $region9
    $region8: #{tpu_custom_call.1} parent=1 // pred_region
      _
    $region9: #{tpu_custom_call.1} parent=1 // pred_fallthru
      _
    // Predicated region
    $region10: #{tpu_custom_call.1} parent=1 // pred_check
      _
    $region11: #{tpu_custom_call.1} parent=1 // pred_check_branch
      %17 = sbr.rel (0) target = $region13
    $region12: #{tpu_custom_call.1} parent=1 // pred_region
      _
    $region13: #{tpu_custom_call.1} parent=1 // pred_fallthru
      _
    // Predicated region
    $region14: #{tpu_custom_call.1} parent=1 // pred_check
      _
    $region15: #{tpu_custom_call.1} parent=1 // pred_check_branch
      %19 = sbr.rel (0) target = $region17
    $region16: #{tpu_custom_call.1} parent=1 // pred_region
      _
    $region17: #{tpu_custom_call.1} parent=1 // pred_fallthru
      _
    // Predicated region
    $region18: #{tpu_custom_call.1} parent=1 // pred_check
      _
    $region19: #{tpu_custom_call.1} parent=1 // pred_check_branch
      %21 = sbr.rel (0) target = $region21
    $region20: #{tpu_custom_call.1} parent=1 // pred_region
      _
    $region21: #{tpu_custom_call.1} parent=1 // pred_fallthru
      _
    // Predicated region
    $region22: #{tpu_custom_call.1} parent=1 // pred_check
      _
    $region23: #{tpu_custom_call.1} parent=1 // pred_check_branch
      %23 = sbr.rel (0) target = $region25
    $region24: #{tpu_custom_call.1} parent=1 // pred_region
      _
    $region25: #{tpu_custom_call.1} parent=1 // pred_fallthru
      _
    %v24 = vld [vmem:[%s0] sm:$0xff]
    %v25 = vld [vmem:[%s0 + $0x8] sm:$0xff]
    %v26 = vld [vmem:[%s0 + $0x10] sm:$0xff]
    %v27 = vld [vmem:[%s0 + $0x18] sm:$0xff]
    %v28 = vld [vmem:[%s0 + $0x20] sm:$0xff]
    %v29 = vld [vmem:[%s0 + $0x28] sm:$0xff]
    %v30 = vld [vmem:[%s0 + $0x30] sm:$0xff]
    %v31 = vld [vmem:[%s0 + $0x38] sm:$0xff]
    %v32 = vld [vmem:[%s0 + $0x40] sm:$0xff]
    %v33 = vld [vmem:[%s0 + $0x48] sm:$0xff]
    %v34 = vld [vmem:[%s0 + $0x50] sm:$0xff]
    %v35 = vld [vmem:[%s0 + $0x58] sm:$0xff]
    %v36 = vld [vmem:[%s0 + $0x60] sm:$0xff]
    %v37 = vld [vmem:[%s0 + $0x68] sm:$0xff]
    %v38 = vld [vmem:[%s0 + $0x70] sm:$0xff]
    %v39 = vld [vmem:[%s0 + $0x78] sm:$0xff]
    %v40 = vld [vmem:[%s0 + $0x80] sm:$0xff]
    %v41 = vld [vmem:[%s0 + $0x88] sm:$0xff]
    %v42 = vld [vmem:[%s0 + $0x90] sm:$0xff]
    %v43 = vld [vmem:[%s0 + $0x98] sm:$0xff]
    %v44 = vld [vmem:[%s0 + $0xa0] sm:$0xff]
    %v45 = vld [vmem:[%s0 + $0xa8] sm:$0xff]
    %v46 = vld [vmem:[%s0 + $0xb0] sm:$0xff]
    %v47 = vld [vmem:[%s0 + $0xb8] sm:$0xff]
    %v48 = vld [vmem:[%s0 + $0xc0] sm:$0xff]
    %v49 = vld [vmem:[%s0 + $0xc8] sm:$0xff]
    %v50 = vld [vmem:[%s0 + $0xd0] sm:$0xff]
    %v51 = vld [vmem:[%s0 + $0xd8] sm:$0xff]
    %v52 = vld [vmem:[%s0 + $0xe0] sm:$0xff]
    %v53 = vld [vmem:[%s0 + $0xe8] sm:$0xff]
    %v54 = vld [vmem:[%s0 + $0xf0] sm:$0xff]
    %v55 = vld [vmem:[%s0 + $0xf8] sm:$0xff]
    %v56 = vld [vmem:[%s1] sm:$0xff]
    %v57 = vld [vmem:[%s1 + $0x8] sm:$0xf]
    %v58 = vld [vmem:[%s2] sm:$0x1]
    %v60 = vperm.slane %v58, 0
    %vm62 = vcmask 97280
    %v64 = vsel %vm62, %v24, 0
    %v67 = vsel %vm62, %v25, 0
    %v70 = vsel %vm62, %v26, 0
    %v73 = vsel %vm62, %v27, 0
    %v76 = vsel %vm62, %v28, 0
    %v79 = vsel %vm62, %v29, 0
    %v82 = vsel %vm62, %v30, 0
    %v85 = vsel %vm62, %v31, 0
    %v88 = vsel %vm62, %v32, 0
    %v91 = vsel %vm62, %v33, 0
    %v94 = vsel %vm62, %v34, 0
    %v97 = vsel %vm62, %v35, 0
    %v100 = vsel %vm62, %v36, 0
    %v103 = vsel %vm62, %v37, 0
    %v106 = vsel %vm62, %v38, 0
    %v109 = vsel %vm62, %v39, 0
    %v112 = vsel %vm62, %v40, 0
    %v115 = vsel %vm62, %v41, 0
    %v118 = vsel %vm62, %v42, 0
    %v121 = vsel %vm62, %v43, 0
    %v124 = vsel %vm62, %v44, 0
    %v127 = vsel %vm62, %v45, 0
    %v130 = vsel %vm62, %v46, 0
    %v133 = vsel %vm62, %v47, 0
    %v136 = vsel %vm62, %v48, 0
    %v139 = vsel %vm62, %v49, 0
    %v142 = vsel %vm62, %v50, 0
    %v145 = vsel %vm62, %v51, 0
    %v148 = vsel %vm62, %v52, 0
    %v151 = vsel %vm62, %v53, 0
    %v154 = vsel %vm62, %v54, 0
    %v157 = vsel %vm62, %v55, 0
    %vm159 = vcmask 1043456
    %v161 = vsel %vm159, %v57, 0
    %163 = vmatpush.msra.mxu0 0.0
    %164 = vmatpush.msra.mxu0 0.0
    %165 = vmatpush.msra.mxu0 0.0
    %166 = vmatpush.msra.mxu0 0.0
    %167 = vmatpush.msra.mxu0 0.0
    %168 = vmatpush.msra.mxu0 0.0
    %169 = vmatpush.msra.mxu0 0.0
    %170 = vmatpush.msra.mxu0 0.0
    %171 = vmatpush.msra.mxu0 0.0
    %172 = vmatpush.msra.mxu0 0.0
    %173 = vmatpush.msra.mxu0 0.0
    %174 = vmatpush.msra.mxu0 0.0
    %175 = vmatpush.msra.mxu0 0.0
    %176 = vmatpush.msra.mxu0 0.0
    %177 = vmatpush.msra.mxu0 %v161
    %178 = vmatpush.msra.mxu0 %v56
    %179 = vmatmul.f32.gmra.mxu0 %v64
    %v180 = vpop.f32.mrf.mxu0
    %v181 = vadd.f32 %v60, %v180
    %182 = vmatmul.f32.gmra.mxu0 %v67
    %v183 = vpop.f32.mrf.mxu0
    %v184 = vadd.f32 %v60, %v183
    %185 = vmatmul.f32.gmra.mxu0 %v70
    %v186 = vpop.f32.mrf.mxu0
    %v187 = vadd.f32 %v60, %v186
    %188 = vmatmul.f32.gmra.mxu0 %v73
    %v189 = vpop.f32.mrf.mxu0
    %v190 = vadd.f32 %v60, %v189
    %191 = vmatmul.f32.gmra.mxu0 %v76
    %v192 = vpop.f32.mrf.mxu0
    %v193 = vadd.f32 %v60, %v192
    %194 = vmatmul.f32.gmra.mxu0 %v79
    %v195 = vpop.f32.mrf.mxu0
    %v196 = vadd.f32 %v60, %v195
    %197 = vmatmul.f32.gmra.mxu0 %v82
    %v198 = vpop.f32.mrf.mxu0
    %v199 = vadd.f32 %v60, %v198
    %200 = vmatmul.f32.gmra.mxu0 %v85
    %v201 = vpop.f32.mrf.mxu0
    %v202 = vadd.f32 %v60, %v201
    %203 = vmatmul.f32.gmra.mxu0 %v88
    %v204 = vpop.f32.mrf.mxu0
    %v205 = vadd.f32 %v60, %v204
    %206 = vmatmul.f32.gmra.mxu0 %v91
    %v207 = vpop.f32.mrf.mxu0
    %v208 = vadd.f32 %v60, %v207
    %209 = vmatmul.f32.gmra.mxu0 %v94
    %v210 = vpop.f32.mrf.mxu0
    %v211 = vadd.f32 %v60, %v210
    %212 = vmatmul.f32.gmra.mxu0 %v97
    %v213 = vpop.f32.mrf.mxu0
    %v214 = vadd.f32 %v60, %v213
    %215 = vmatmul.f32.gmra.mxu0 %v100
    %v216 = vpop.f32.mrf.mxu0
    %v217 = vadd.f32 %v60, %v216
    %218 = vmatmul.f32.gmra.mxu0 %v103
    %v219 = vpop.f32.mrf.mxu0
    %v220 = vadd.f32 %v60, %v219
    %221 = vmatmul.f32.gmra.mxu0 %v106
    %v222 = vpop.f32.mrf.mxu0
    %v223 = vadd.f32 %v60, %v222
    %224 = vmatmul.f32.gmra.mxu0 %v109
    %v225 = vpop.f32.mrf.mxu0
    %v226 = vadd.f32 %v60, %v225
    %227 = vmatmul.f32.gmra.mxu0 %v112
    %v228 = vpop.f32.mrf.mxu0
    %v229 = vadd.f32 %v60, %v228
    %230 = vmatmul.f32.gmra.mxu0 %v115
    %v231 = vpop.f32.mrf.mxu0
    %v232 = vadd.f32 %v60, %v231
    %233 = vmatmul.f32.gmra.mxu0 %v118
    %v234 = vpop.f32.mrf.mxu0
    %v235 = vadd.f32 %v60, %v234
    %236 = vmatmul.f32.gmra.mxu0 %v121
    %v237 = vpop.f32.mrf.mxu0
    %v238 = vadd.f32 %v60, %v237
    %239 = vmatmul.f32.gmra.mxu0 %v124
    %v240 = vpop.f32.mrf.mxu0
    %v241 = vadd.f32 %v60, %v240
    %242 = vmatmul.f32.gmra.mxu0 %v127
    %v243 = vpop.f32.mrf.mxu0
    %v244 = vadd.f32 %v60, %v243
    %245 = vmatmul.f32.gmra.mxu0 %v130
    %v246 = vpop.f32.mrf.mxu0
    %v247 = vadd.f32 %v60, %v246
    %248 = vmatmul.f32.gmra.mxu0 %v133
    %v249 = vpop.f32.mrf.mxu0
    %v250 = vadd.f32 %v60, %v249
    %251 = vmatmul.f32.gmra.mxu0 %v136
    %v252 = vpop.f32.mrf.mxu0
    %v253 = vadd.f32 %v60, %v252
    %254 = vmatmul.f32.gmra.mxu0 %v139
    %v255 = vpop.f32.mrf.mxu0
    %v256 = vadd.f32 %v60, %v255
    %257 = vmatmul.f32.gmra.mxu0 %v142
    %v258 = vpop.f32.mrf.mxu0
    %v259 = vadd.f32 %v60, %v258
    %260 = vmatmul.f32.gmra.mxu0 %v145
    %v261 = vpop.f32.mrf.mxu0
    %v262 = vadd.f32 %v60, %v261
    %263 = vmatmul.f32.gmra.mxu0 %v148
    %v264 = vpop.f32.mrf.mxu0
    %v265 = vadd.f32 %v60, %v264
    %266 = vmatmul.f32.gmra.mxu0 %v151
    %v267 = vpop.f32.mrf.mxu0
    %v268 = vadd.f32 %v60, %v267
    %269 = vmatmul.f32.gmra.mxu0 %v154
    %v270 = vpop.f32.mrf.mxu0
    %v271 = vadd.f32 %v60, %v270
    %272 = vmatmul.f32.gmra.mxu0 %v157
    %v273 = vpop.f32.mrf.mxu0
    %v274 = vadd.f32 %v60, %v273
    %275 = vdwg.mxu0
    %v276 = vmax.f32 %v181, 0.0
    %v277 = vmax.f32 %v184, 0.0
    %v278 = vmax.f32 %v187, 0.0
    %v279 = vmax.f32 %v190, 0.0
    %v280 = vmax.f32 %v193, 0.0
    %v281 = vmax.f32 %v196, 0.0
    %v282 = vmax.f32 %v199, 0.0
    %v283 = vmax.f32 %v202, 0.0
    %v284 = vmax.f32 %v205, 0.0
    %v285 = vmax.f32 %v208, 0.0
    %v286 = vmax.f32 %v211, 0.0
    %v287 = vmax.f32 %v214, 0.0
    %v288 = vmax.f32 %v217, 0.0
    %v289 = vmax.f32 %v220, 0.0
    %v290 = vmax.f32 %v223, 0.0
    %v291 = vmax.f32 %v226, 0.0
    %v292 = vmax.f32 %v229, 0.0
    %v293 = vmax.f32 %v232, 0.0
    %v294 = vmax.f32 %v235, 0.0
    %v295 = vmax.f32 %v238, 0.0
    %v296 = vmax.f32 %v241, 0.0
    %v297 = vmax.f32 %v244, 0.0
    %v298 = vmax.f32 %v247, 0.0
    %v299 = vmax.f32 %v250, 0.0
    %v300 = vmax.f32 %v253, 0.0
    %v301 = vmax.f32 %v256, 0.0
    %v302 = vmax.f32 %v259, 0.0
    %v303 = vmax.f32 %v262, 0.0
    %v304 = vmax.f32 %v265, 0.0
    %v305 = vmax.f32 %v268, 0.0
    %v306 = vmax.f32 %v271, 0.0
    %v307 = vmax.f32 %v274, 0.0
    %vm308 = vcmask 261120
    %v309 = vsel %vm308, %v276, 0.0
    %v310 = vsel %vm308, %v277, 0.0
    %v311 = vadd.f32 %v309, %v310
    %v312 = vrot.slane %v311, 4
    %v313 = vadd.f32 %v311, %v312
    %v314 = vrot.slane %v313, 2
    %v315 = vadd.f32 %v313, %v314
    %v316 = vrot.slane %v315, 1
    %v317 = vadd.f32 %v315, %v316
    %v318 = vsel %vm308, %v278, 0.0
    %v319 = vsel %vm308, %v279, 0.0
    %v320 = vadd.f32 %v318, %v319
    %v321 = vrot.slane %v320, 4
    %v322 = vadd.f32 %v320, %v321
    %v323 = vrot.slane %v322, 2
    %v324 = vadd.f32 %v322, %v323
    %v325 = vrot.slane %v324, 1
    %v326 = vadd.f32 %v324, %v325
    %v327 = vsel %vm308, %v280, 0.0
    %v328 = vsel %vm308, %v281, 0.0
    %v329 = vadd.f32 %v327, %v328
    %v330 = vrot.slane %v329, 4
    %v331 = vadd.f32 %v329, %v330
    %v332 = vrot.slane %v331, 2
    %v333 = vadd.f32 %v331, %v332
    %v334 = vrot.slane %v333, 1
    %v335 = vadd.f32 %v333, %v334
    %v336 = vsel %vm308, %v282, 0.0
    %v337 = vsel %vm308, %v283, 0.0
    %v338 = vadd.f32 %v336, %v337
    %v339 = vrot.slane %v338, 4
    %v340 = vadd.f32 %v338, %v339
    %v341 = vrot.slane %v340, 2
    %v342 = vadd.f32 %v340, %v341
    %v343 = vrot.slane %v342, 1
    %v344 = vadd.f32 %v342, %v343
    %v345 = vsel %vm308, %v284, 0.0
    %v346 = vsel %vm308, %v285, 0.0
    %v347 = vadd.f32 %v345, %v346
    %v348 = vrot.slane %v347, 4
    %v349 = vadd.f32 %v347, %v348
    %v350 = vrot.slane %v349, 2
    %v351 = vadd.f32 %v349, %v350
    %v352 = vrot.slane %v351, 1
    %v353 = vadd.f32 %v351, %v352
    %v354 = vsel %vm308, %v286, 0.0
    %v355 = vsel %vm308, %v287, 0.0
    %v356 = vadd.f32 %v354, %v355
    %v357 = vrot.slane %v356, 4
    %v358 = vadd.f32 %v356, %v357
    %v359 = vrot.slane %v358, 2
    %v360 = vadd.f32 %v358, %v359
    %v361 = vrot.slane %v360, 1
    %v362 = vadd.f32 %v360, %v361
    %v363 = vsel %vm308, %v288, 0.0
    %v364 = vsel %vm308, %v289, 0.0
    %v365 = vadd.f32 %v363, %v364
    %v366 = vrot.slane %v365, 4
    %v367 = vadd.f32 %v365, %v366
    %v368 = vrot.slane %v367, 2
    %v369 = vadd.f32 %v367, %v368
    %v370 = vrot.slane %v369, 1
    %v371 = vadd.f32 %v369, %v370
    %v372 = vsel %vm308, %v290, 0.0
    %v373 = vsel %vm308, %v291, 0.0
    %v374 = vadd.f32 %v372, %v373
    %v375 = vrot.slane %v374, 4
    %v376 = vadd.f32 %v374, %v375
    %v377 = vrot.slane %v376, 2
    %v378 = vadd.f32 %v376, %v377
    %v379 = vrot.slane %v378, 1
    %v380 = vadd.f32 %v378, %v379
    %v381 = vsel %vm308, %v292, 0.0
    %v382 = vsel %vm308, %v293, 0.0
    %v383 = vadd.f32 %v381, %v382
    %v384 = vrot.slane %v383, 4
    %v385 = vadd.f32 %v383, %v384
    %v386 = vrot.slane %v385, 2
    %v387 = vadd.f32 %v385, %v386
    %v388 = vrot.slane %v387, 1
    %v389 = vadd.f32 %v387, %v388
    %v390 = vsel %vm308, %v294, 0.0
    %v391 = vsel %vm308, %v295, 0.0
    %v392 = vadd.f32 %v390, %v391
    %v393 = vrot.slane %v392, 4
    %v394 = vadd.f32 %v392, %v393
    %v395 = vrot.slane %v394, 2
    %v396 = vadd.f32 %v394, %v395
    %v397 = vrot.slane %v396, 1
    %v398 = vadd.f32 %v396, %v397
    %v399 = vsel %vm308, %v296, 0.0
    %v400 = vsel %vm308, %v297, 0.0
    %v401 = vadd.f32 %v399, %v400
    %v402 = vrot.slane %v401, 4
    %v403 = vadd.f32 %v401, %v402
    %v404 = vrot.slane %v403, 2
    %v405 = vadd.f32 %v403, %v404
    %v406 = vrot.slane %v405, 1
    %v407 = vadd.f32 %v405, %v406
    %v408 = vsel %vm308, %v298, 0.0
    %v409 = vsel %vm308, %v299, 0.0
    %v410 = vadd.f32 %v408, %v409
    %v411 = vrot.slane %v410, 4
    %v412 = vadd.f32 %v410, %v411
    %v413 = vrot.slane %v412, 2
    %v414 = vadd.f32 %v412, %v413
    %v415 = vrot.slane %v414, 1
    %v416 = vadd.f32 %v414, %v415
    %v417 = vsel %vm308, %v300, 0.0
    %v418 = vsel %vm308, %v301, 0.0
    %v419 = vadd.f32 %v417, %v418
    %v420 = vrot.slane %v419, 4
    %v421 = vadd.f32 %v419, %v420
    %v422 = vrot.slane %v421, 2
    %v423 = vadd.f32 %v421, %v422
    %v424 = vrot.slane %v423, 1
    %v425 = vadd.f32 %v423, %v424
    %v426 = vsel %vm308, %v302, 0.0
    %v427 = vsel %vm308, %v303, 0.0
    %v428 = vadd.f32 %v426, %v427
    %v429 = vrot.slane %v428, 4
    %v430 = vadd.f32 %v428, %v429
    %v431 = vrot.slane %v430, 2
    %v432 = vadd.f32 %v430, %v431
    %v433 = vrot.slane %v432, 1
    %v434 = vadd.f32 %v432, %v433
    %v435 = vsel %vm308, %v304, 0.0
    %v436 = vsel %vm308, %v305, 0.0
    %v437 = vadd.f32 %v435, %v436
    %v438 = vrot.slane %v437, 4
    %v439 = vadd.f32 %v437, %v438
    %v440 = vrot.slane %v439, 2
    %v441 = vadd.f32 %v439, %v440
    %v442 = vrot.slane %v441, 1
    %v443 = vadd.f32 %v441, %v442
    %v444 = vsel %vm308, %v306, 0.0
    %v445 = vsel %vm308, %v307, 0.0
    %v446 = vadd.f32 %v444, %v445
    %v447 = vrot.slane %v446, 4
    %v448 = vadd.f32 %v446, %v447
    %v449 = vrot.slane %v448, 2
    %v450 = vadd.f32 %v448, %v449
    %v451 = vrot.slane %v450, 1
    %v452 = vadd.f32 %v450, %v451
    %v453 = vmul.f32 %v317, 0.0625
    %v454 = vmul.f32 %v326, 0.0625
    %v455 = vmul.f32 %v335, 0.0625
    %v456 = vmul.f32 %v344, 0.0625
    %v457 = vmul.f32 %v353, 0.0625
    %v458 = vmul.f32 %v362, 0.0625
    %v459 = vmul.f32 %v371, 0.0625
    %v460 = vmul.f32 %v380, 0.0625
    %v461 = vmul.f32 %v389, 0.0625
    %v462 = vmul.f32 %v398, 0.0625
    %v463 = vmul.f32 %v407, 0.0625
    %v464 = vmul.f32 %v416, 0.0625
    %v465 = vmul.f32 %v425, 0.0625
    %v466 = vmul.f32 %v434, 0.0625
    %v467 = vmul.f32 %v443, 0.0625
    %v468 = vmul.f32 %v452, 0.0625
    %v469 = vld [vmem:[%s3] sm:$0xff]
    %v470 = vld [vmem:[%s3 + $0x8] sm:$0xff]
    %v471 = vld [vmem:[%s3 + $0x10] sm:$0xff]
    %v472 = vld [vmem:[%s3 + $0x18] sm:$0xff]
    %v473 = vld [vmem:[%s4] sm:$0xff]
    %v474 = vld [vmem:[%s4 + $0x8] sm:$0xff]
    %v475 = vld [vmem:[%s4 + $0x10] sm:$0xff]
    %v476 = vld [vmem:[%s4 + $0x18] sm:$0xff]
    %v478 = vsel %vm308, 0.0, 0
    %480 = vmatpush.msra.mxu0 0.0
    %481 = vmatpush.msra.mxu0 0.0
    %482 = vmatpush.msra.mxu0 0.0
    %483 = vmatpush.msra.mxu0 0.0
    %484 = vmatpush.msra.mxu0 0.0
    %485 = vmatpush.msra.mxu0 0.0
    %486 = vmatpush.msra.mxu0 0.0
    %487 = vmatpush.msra.mxu0 0.0
    %488 = vmatpush.msra.mxu0 0.0
    %489 = vmatpush.msra.mxu0 0.0
    %490 = vmatpush.msra.mxu0 0.0
    %491 = vmatpush.msra.mxu0 0.0
    %492 = vmatpush.msra.mxu0 %v476
    %493 = vmatpush.msra.mxu0 %v475
    %494 = vmatpush.msra.mxu0 %v474
    %495 = vmatpush.msra.mxu0 %v473
    %496 = vmatmul.f32.gmra.mxu0 %v478
    %v497 = vpop.f32.mrf.mxu0
    %v498 = vadd.f32 0.0, %v497
    %499 = vdwg.mxu0
    %vm508 = vcmask 1041409
    %v509 = vsel %vm508, %v454, %v453
    %vm510 = vcmask 1042434
    %v511 = vsel %vm510, %v455, %v509
    %vm512 = vcmask 1043459
    %v513 = vsel %vm512, %v456, %v511
    %vm514 = vcmask 1044484
    %v515 = vsel %vm514, %v457, %v513
    %vm516 = vcmask 1045509
    %v517 = vsel %vm516, %v458, %v515
    %vm518 = vcmask 1046534
    %v519 = vsel %vm518, %v459, %v517
    %vm520 = vcmask 1047559
    %v521 = vsel %vm520, %v460, %v519
    %v522 = vsel %vm308, %v521, 0
    %524 = vmatpush.msra.mxu0 0.0
    %525 = vmatpush.msra.mxu0 0.0
    %526 = vmatpush.msra.mxu0 0.0
    %527 = vmatpush.msra.mxu0 0.0
    %528 = vmatpush.msra.mxu0 0.0
    %529 = vmatpush.msra.mxu0 0.0
    %530 = vmatpush.msra.mxu0 0.0
    %531 = vmatpush.msra.mxu0 0.0
    %532 = vmatpush.msra.mxu0 0.0
    %533 = vmatpush.msra.mxu0 0.0
    %534 = vmatpush.msra.mxu0 0.0
    %535 = vmatpush.msra.mxu0 0.0
    %536 = vmatpush.msra.mxu0 %v472
    %537 = vmatpush.msra.mxu0 %v471
    %538 = vmatpush.msra.mxu0 %v470
    %539 = vmatpush.msra.mxu0 %v469
    %540 = vmatmul.f32.gmra.mxu0 %v522
    %v541 = vpop.f32.mrf.mxu0
    %v542 = vadd.f32 %v498, %v541
    %543 = vdwg.mxu0
    %v544 = vld [vmem:[%s5] sm:$0x1]
    %v546 = vperm.slane %v544, 0
    %v548 = vadd.f32 %v542, %v546
    %v549 = vxor.u32 %v548, 2147483648
    %v550 = vmul.f32 %v549, 1.442695
    %v551 = vpow.pop %v550
    %v552 = vadd.f32 %v551, 1.0
    %v553 = vrcp.pop %v552
    %v554 = vmul.f32 %v552, %v553
    %v555 = vsub.f32 1.0, %v554
    %v556 = vmul.f32 %v553, %v555
    %v557 = vadd.f32 %v553, %v556
    %vm558 = vweird.f32 %v552
    %vm559 = vweird.f32 %v553
    %vm560 = vmor %vm558, %vm559
    %v561 = vsel %vm560, %v553, %v557
    %v562 = vand.u32 2147483647, %v552
    %vm563 = vcmp.eq.f32.partialorder %v562, 8.507059e+37
    %v564 = vand.u32 %v552, 2147483648
    %v565 = vor.u32 1.1754944e-38, %v564
    %v566 = vsel %vm563, %v565, %v561
    %v567 = vmul.f32 1.0, %v566
    %v568 = vtanh.pop %v548
    %v569 = vmul.f32 %v567, 0.0
    %571 = vrot.lane.b32.xlu0 %v568, 32
    %v572 = vpop.permute.xlu0 %571
    %v574 = vmul.f32 %v567, %v572
    %576 = vrot.lane.b32.xlu0 %v574, 32
    %v577 = vpop.permute.xlu0 %576
    %v579 = vadd.f32 %v569, %v577
    %v580 = vtanh.pop %v579
    %582 = vrot.lane.b32.xlu0 %v580, 32
    %v583 = vpop.permute.xlu0 %582
    %v585 = vmul.f32 %v567, %v583
    %587 = vrot.lane.b32.xlu0 %v585, 64
    %v588 = vpop.permute.xlu0 %587
    %590 = vst.msk [vmem:[#allocation2] sm:$0xff] %vm308, %v588
    %v591 = vld [vmem:[%s3] sm:$0xff]
    %v592 = vld [vmem:[%s3 + $0x8] sm:$0xff]
    %v593 = vld [vmem:[%s3 + $0x10] sm:$0xff]
    %v594 = vld [vmem:[%s3 + $0x18] sm:$0xff]
    %v595 = vld [vmem:[%s4] sm:$0xff]
    %v596 = vld [vmem:[%s4 + $0x8] sm:$0xff]
    %v597 = vld [vmem:[%s4 + $0x10] sm:$0xff]
    %v598 = vld [vmem:[%s4 + $0x18] sm:$0xff]
    %v599 = vsel %vm308, %v588, 0
    %601 = vmatpush.msra.mxu0 0.0
    %602 = vmatpush.msra.mxu0 0.0
    %603 = vmatpush.msra.mxu0 0.0
    %604 = vmatpush.msra.mxu0 0.0
    %605 = vmatpush.msra.mxu0 0.0
    %606 = vmatpush.msra.mxu0 0.0
    %607 = vmatpush.msra.mxu0 0.0
    %608 = vmatpush.msra.mxu0 0.0
    %609 = vmatpush.msra.mxu0 0.0
    %610 = vmatpush.msra.mxu0 0.0
    %611 = vmatpush.msra.mxu0 0.0
    %612 = vmatpush.msra.mxu0 0.0
    %613 = vmatpush.msra.mxu0 %v598
    %614 = vmatpush.msra.mxu0 %v597
    %615 = vmatpush.msra.mxu0 %v596
    %616 = vmatpush.msra.mxu0 %v595
    %617 = vmatmul.f32.gmra.mxu0 %v599
    %v618 = vpop.f32.mrf.mxu0
    %v619 = vadd.f32 0.0, %v618
    %620 = vdwg.mxu0
    %v629 = vsel %vm508, %v462, %v461
    %v630 = vsel %vm510, %v463, %v629
    %v631 = vsel %vm512, %v464, %v630
    %v632 = vsel %vm514, %v465, %v631
    %v633 = vsel %vm516, %v466, %v632
    %v634 = vsel %vm518, %v467, %v633
    %v635 = vsel %vm520, %v468, %v634
    %v636 = vsel %vm308, %v635, 0
    %638 = vmatpush.msra.mxu0 0.0
    %639 = vmatpush.msra.mxu0 0.0
    %640 = vmatpush.msra.mxu0 0.0
    %641 = vmatpush.msra.mxu0 0.0
    %642 = vmatpush.msra.mxu0 0.0
    %643 = vmatpush.msra.mxu0 0.0
    %644 = vmatpush.msra.mxu0 0.0
    %645 = vmatpush.msra.mxu0 0.0
    %646 = vmatpush.msra.mxu0 0.0
    %647 = vmatpush.msra.mxu0 0.0
    %648 = vmatpush.msra.mxu0 0.0
    %649 = vmatpush.msra.mxu0 0.0
    %650 = vmatpush.msra.mxu0 %v594
    %651 = vmatpush.msra.mxu0 %v593
    %652 = vmatpush.msra.mxu0 %v592
    %653 = vmatpush.msra.mxu0 %v591
    %654 = vmatmul.f32.gmra.mxu0 %v636
    %v655 = vpop.f32.mrf.mxu0
    %v656 = vadd.f32 %v619, %v655
    %657 = vdwg.mxu0
    %v658 = vld [vmem:[%s5] sm:$0x1]
    %v660 = vperm.slane %v658, 0
    %v662 = vadd.f32 %v656, %v660
    %v663 = vxor.u32 %v662, 2147483648
    %v664 = vmul.f32 %v663, 1.442695
    %v665 = vpow.pop %v664
    %v666 = vadd.f32 %v665, 1.0
    %v667 = vrcp.pop %v666
    %v668 = vmul.f32 %v666, %v667
    %v669 = vsub.f32 1.0, %v668
    %v670 = vmul.f32 %v667, %v669
    %v671 = vadd.f32 %v667, %v670
    %vm672 = vweird.f32 %v666
    %vm673 = vweird.f32 %v667
    %vm674 = vmor %vm672, %vm673
    %v675 = vsel %vm674, %v667, %v671
    %v676 = vand.u32 2147483647, %v666
    %vm677 = vcmp.eq.f32.partialorder %v676, 8.507059e+37
    %v678 = vand.u32 %v666, 2147483648
    %v679 = vor.u32 1.1754944e-38, %v678
    %v680 = vsel %vm677, %v679, %v675
    %v681 = vmul.f32 1.0, %v680
    %v682 = vtanh.pop %v662
    %v683 = vmul.f32 %v681, %v579
    %685 = vrot.lane.b32.xlu0 %v682, 32
    %v686 = vpop.permute.xlu0 %685
    %v688 = vmul.f32 %v681, %v686
    %690 = vrot.lane.b32.xlu0 %v688, 32
    %v691 = vpop.permute.xlu0 %690
    %v693 = vadd.f32 %v683, %v691
    %v694 = vtanh.pop %v693
    %696 = vrot.lane.b32.xlu0 %v694, 32
    %v697 = vpop.permute.xlu0 %696
    %v699 = vmul.f32 %v681, %v697
    %701 = vrot.lane.b32.xlu0 %v699, 64
    %v702 = vpop.permute.xlu0 %701
    %s704 = scalar_lea.vmem [#allocation2], 8
    %705 = vst.msk [vmem:[%s704] sm:$0xff] %vm308, %v702
    // Predicated region
    $region26: #{tpu_custom_call.1} parent=1 // pred_check
      _
    $region27: #{tpu_custom_call.1} parent=1 // pred_check_branch
      %707 = sbr.rel (0) target = $region29
    $region28: #{tpu_custom_call.1} parent=1 // pred_region
      %709 = vsyncadd [#allocation3], 0
      %s710 = sshll.u32 [#allocation2], 4
      %s711 = int_to_ptr.vmem [resolvable:$true] %s710
      %s712 = sshll.u32 %s6, 4
      %s713 = int_to_ptr.hbm [resolvable:$true] %s712
      %718 = dma.vmem_to_hbm [thread:$0]  %s711, 256, %s713, [#allocation3], 128, 128, 8
    $region29: #{tpu_custom_call.1} parent=1 // pred_fallthru
      _
    // Predicated region
    $region30: #{tpu_custom_call.1} parent=1 // pred_check
      _
    $region31: #{tpu_custom_call.1} parent=1 // pred_check_branch
      %720 = sbr.rel (0) target = $region33
    $region32: #{tpu_custom_call.1} parent=1 // pred_region
      %722 = dma.done [#allocation3], 256
    $region33: #{tpu_custom_call.1} parent=1 // pred_fallthru
      _
    %723 = vsyncpa [#allocation3], 1

</llo_original>
